<compile_context>
chip_gen: v7x
topology: tpu7x:2x2x1
jax: 0.10.0
libtpu: 0.0.40
codegen_flags: <defaults>
</compile_context>

<pallas_src>
import jax
import jax.numpy as jnp
from jax.experimental import pallas as pl
from jax.experimental.pallas import tpu as pltpu


def _zero_kernel(x_ref, o_ref):
    # Single full-block pass: read, multiply by 0.0 on the VPU, store
    # lane-dense rows.  x * 0.0 (not zeros) to preserve NaN/Inf semantics.
    o_ref[...] = x_ref[...] * 0.0


def zero(x, *, stride):
    """Pallas implementation of the Zero module's forward (NCHW input)."""
    x = x.astype(jnp.float32)
    if stride != 1:
        # Strided spatial subsampling is pure indexing (no compute); doing it
        # in the wrapper keeps the kernel a lane-dense full-block op and avoids
        # lane-strided loads inside the kernel.
        # TODO(synk): could be moved in-kernel via pl.ds(..., stride=stride) if
        # an all-in-kernel variant is ever required.
        x = x[:, :, ::stride, ::stride]
    N, C, H, W = x.shape

    # Lane-dense 2-D view: last dim = H*W (256 for the test shape) so stores
    # are unmasked full-row vst; leading dim N*C maps to sublanes.
    x2d = x.reshape(N * C, H * W)

    out2d = pl.pallas_call(
        _zero_kernel,
        out_shape=jax.ShapeDtypeStruct(x2d.shape, x2d.dtype),
        in_specs=[pl.BlockSpec(memory_space=pltpu.MemorySpace.VMEM)],
        out_specs=pl.BlockSpec(memory_space=pltpu.MemorySpace.VMEM),
    )(x2d)

    return out2d.reshape(N, C, H, W)


def reference(x, *, stride):
    """Pure-JAX reference matching the PyTorch forward."""
    if stride == 1:
        return x * 0.0
    return x[:, :, ::stride, ::stride] * 0.0


if __name__ == "__main__":
    N, C, H, W = 2, 4, 16, 16
    key = jax.random.PRNGKey(0)
    x = jax.random.normal(key, (N, C, H, W), jnp.float32)

    # stride = 1 (the module's default path) and stride = 2 (subsampled path).
    for stride in (1, 2):
        out = jax.block_until_ready(zero(x, stride=stride))
        ref = reference(x, stride=stride)
        assert out.shape == ref.shape, (stride, out.shape, ref.shape)
        max_err = float(jnp.max(jnp.abs(out - ref)))
        assert max_err == 0.0, (stride, max_err)

    print("KERNEL_OK")
</pallas_src>

<mosaic_0001>
module attributes {stable_mosaic.version = 11 : i64} {
  func.func @_zero_kernel(%arg0: memref<8x256xf32, #tpu.memory_space<vmem>>, %arg1: memref<8x256xf32, #tpu.memory_space<vmem>>) attributes {dimension_semantics = [], scalar_prefetch = 0 : i64, scratch_operands = 0 : i64, tpu.core_type = #tpu.core_type<tc>} {
    %c0 = arith.constant 0 : index
    %c0_0 = arith.constant 0 : index
    %0 = vector.load %arg0[%c0, %c0_0] : memref<8x256xf32, #tpu.memory_space<vmem>>, vector<8x256xf32>
    %cst = arith.constant 0.000000e+00 : f32
    %1 = vector.broadcast %cst : f32 to vector<8x256xf32>
    %2 = arith.mulf %0, %1 : vector<8x256xf32>
    %c0_1 = arith.constant 0 : index
    %c0_2 = arith.constant 0 : index
    %3 = vector.load %arg1[%c0_1, %c0_2] : memref<8x256xf32, #tpu.memory_space<vmem>>, vector<8x256xf32>
    tpu.vector_store %arg1[%c0_1, %c0_2], %2 {strides = array<i32>} : memref<8x256xf32, #tpu.memory_space<vmem>>, vector<8x256xf32>,
    return
  }
}

</mosaic_0001>

<llo_original>
// kernel: tpu_custom_call.1
$region0: #{tpu_custom_call.1}
  #allocation0 [shape = 'u32[]', space=smem, size = 0x4, offset = 0x4, fixed_abs, tag = 'smem constant byte address 0x4 - core index']
  #allocation1 [shape = 'u32[144,128]{1,0:T(1,128)}', space=vmem, size = 0x12000, scoped, tag = 'internal scratch']
  %s0 = inlined_call_operand.hbm [shape: f32[8,256], index: 0, kind: input, shape index: {}]
  %s1 = inlined_call_operand.hbm [shape: f32[8,256], index: 1, kind: output, shape index: {}]
  %s2 = sld [smem:[#allocation0]]
  $region18: #{tpu_custom_call.1} parent=0
    _
  %s4 = ssub.s32 1, %s2
  %s5 = scalar_select 0, %s4, %s2
  $region1: #{tpu_custom_call.1} parent=0
    #allocation2 [shape = 'u8[8192]{0}', space=vmem, size = 0x2000, scoped, tag = 'input window, operand 0, single buffered']
    #allocation3 [shape = 's32[1]{0}', space=sflag, size = 0x4, scoped, tag = 'scoped memory for tpu_custom_call.1']
    #allocation4 [shape = 's32[1]{0}', space=sflag, size = 0x4, scoped, tag = 'scoped memory for tpu_custom_call.1']
    #allocation5 [shape = 'u8[8192]{0}', space=vmem, size = 0x2000, scoped, tag = 'output window, operand 0, single buffered']
    %6 = vsyncpa [#allocation3], 0
    %7 = vsyncpa [#allocation4], 0
    // Predicated region
    $region2: #{tpu_custom_call.1} parent=1 // pred_check
      _
    $region3: #{tpu_custom_call.1} parent=1 // pred_check_branch
      %9 = sbr.rel (0) target = $region5
    $region4: #{tpu_custom_call.1} parent=1 // pred_region
      %s11 = ssub.s32 256, 256
      %12 = vsyncadd [#allocation3], %s11
      %s14 = sshll.u32 [#allocation2], 4
      %s15 = int_to_ptr.vmem [resolvable:$true] %s14
      %17 = dma.hbm_to_vmem [thread:$0]  %s0, 256, %s15, [#allocation3]
    $region5: #{tpu_custom_call.1} parent=1 // pred_fallthru
      _
    // Predicated region
    $region6: #{tpu_custom_call.1} parent=1 // pred_check
      _
    $region7: #{tpu_custom_call.1} parent=1 // pred_check_branch
      %19 = sbr.rel (0) target = $region9
    $region8: #{tpu_custom_call.1} parent=1 // pred_region
      %20 = dma.done [#allocation3], 256
    $region9: #{tpu_custom_call.1} parent=1 // pred_fallthru
      _
    %v21 = vld [vmem:[#allocation2] sm:$0xff]
    %v22 = vld [vmem:[#allocation2 + $0x8] sm:$0xff]
    %v23 = vmul.f32 %v21, 0.0
    %v24 = vmul.f32 %v22, 0.0
    %25 = vst [vmem:[#allocation5] sm:$0xff] %v23
    %26 = vst [vmem:[#allocation5 + $0x8] sm:$0xff] %v24
    // Predicated region
    $region10: #{tpu_custom_call.1} parent=1 // pred_check
      _
    $region11: #{tpu_custom_call.1} parent=1 // pred_check_branch
      %28 = sbr.rel (0) target = $region13
    $region12: #{tpu_custom_call.1} parent=1 // pred_region
      %s30 = ssub.s32 256, 256
      %31 = vsyncadd [#allocation4], %s30
      %s33 = sshll.u32 [#allocation5], 4
      %s34 = int_to_ptr.vmem [resolvable:$true] %s33
      %36 = dma.vmem_to_hbm [thread:$0]  %s34, 256, %s1, [#allocation4]
    $region13: #{tpu_custom_call.1} parent=1 // pred_fallthru
      _
    // Predicated region
    $region14: #{tpu_custom_call.1} parent=1 // pred_check
      _
    $region15: #{tpu_custom_call.1} parent=1 // pred_check_branch
      %38 = sbr.rel (0) target = $region17
    $region16: #{tpu_custom_call.1} parent=1 // pred_region
      %39 = dma.done [#allocation4], 256
    $region17: #{tpu_custom_call.1} parent=1 // pred_fallthru
      _
    %40 = vsyncpa [#allocation3], 1
    %41 = vsyncpa [#allocation4], 1

</llo_original>
